<compile_context>
chip_gen: v5e
topology: v5e:2x2
jax: 0.10.0
libtpu: 0.0.40
codegen_flags: <defaults>
</compile_context>

<pallas_src>
import functools

import jax
import jax.numpy as jnp
from jax import lax
from jax.experimental import pallas as pl
from jax.experimental.pallas import tpu as pltpu


def _round_up(x, m):
    return ((x + m - 1) // m) * m


def _supcon_tile(a_tile, c_all, pos_w, not_self, row_valid, inv_temp):
    """Core per-tile math. Returns sum over valid rows of mean_log_prob_pos."""
    # Fold 1/temperature into the small [TILE_M, D] anchor tile (saves a
    # [TILE_M, N] VPU multiply), then bf16 x bf16 -> f32 on the MXU contracting
    # the shared D axis directly (no transpose of the resident contrast block).
    a = (a_tile.astype(jnp.float32) * inv_temp).astype(jnp.bfloat16)
    logits_raw = lax.dot_general(
        a, c_all, (((1,), (1,)), ((), ())),
        preferred_element_type=jnp.float32)                        # [TILE_M, Nc]

    # Row-max stabilization + masked log-sum-exp (self excluded via not_self).
    logits = logits_raw - jnp.max(logits_raw, axis=1, keepdims=True)
    exp_l = jnp.where(not_self, jnp.exp(logits), 0.0)
    log_prob = logits - jnp.log(jnp.sum(exp_l, axis=1, keepdims=True))

    # Mean log-prob over positive pairs (pos_w already excludes self).
    pos_sum = jnp.sum(pos_w * log_prob, axis=1, keepdims=True)     # [TILE_M, 1]
    pos_cnt = jnp.sum(pos_w, axis=1, keepdims=True)                # [TILE_M, 1]
    # Exact divide on a [TILE_M, 1] column: it scales the loss directly and is
    # negligible next to the [TILE_M, N] work, so approx reciprocal is skipped.
    mean_log_prob_pos = pos_sum / pos_cnt
    # Padded anchor rows (and 0-positive rows of the pad) produce NaN from 0/0;
    # the select discards them. Real 0-positive rows NaN like the reference.
    return jnp.sum(jnp.where(row_valid, mean_log_prob_pos, 0.0))


def _supcon_label_kernel(a_ref, c_ref, alab_ref, clab_ref, out_ref, *,
                         inv_temp, n_anchor):
    # a_ref   : [TILE_M, D]  bf16 anchor tile
    # c_ref   : [Nc, D]      bf16 contrast block (resident across the grid)
    # alab_ref: [TILE_M, 1]  int32 anchor labels
    # clab_ref: [1, Nc]      int32 contrast labels
    # out_ref : [1, 1, 128]  f32 per-tile partial sum (lane-dense)
    tile_m = a_ref.shape[0]
    n_contrast = c_ref.shape[0]
    row_gid = (lax.broadcasted_iota(jnp.int32, (tile_m, 1), 0)
               + pl.program_id(0) * tile_m)                  # global anchor rows
    col_id = lax.broadcasted_iota(jnp.int32, (tile_m, n_contrast), 1)
    not_self = col_id != row_gid                 # logits_mask, built in-kernel
    pos_w = jnp.where(
        jnp.logical_and(alab_ref[...] == clab_ref[...], not_self),
        1.0, 0.0)                                # positive mask, built in-kernel
    row_valid = row_gid < n_anchor
    tile_sum = _supcon_tile(a_ref[...], c_ref[...], pos_w, not_self, row_valid,
                            inv_temp)
    out_ref[...] = jnp.full(out_ref.shape, tile_sum, dtype=jnp.float32)


def _supcon_mask_kernel(a_ref, c_ref, mask_ref, out_ref, *, inv_temp, n_anchor):
    # Fallback for an explicit user-provided (possibly asymmetric / weighted)
    # `mask`: the tiled positive mask has to be streamed, but the self-exclusion
    # mask is still built in-kernel and all other optimizations apply.
    tile_m = a_ref.shape[0]
    n_contrast = c_ref.shape[0]
    row_gid = (lax.broadcasted_iota(jnp.int32, (tile_m, 1), 0)
               + pl.program_id(0) * tile_m)
    col_id = lax.broadcasted_iota(jnp.int32, (tile_m, n_contrast), 1)
    not_self = col_id != row_gid
    pos_w = jnp.where(not_self, mask_ref[...], 0.0)
    row_valid = row_gid < n_anchor
    tile_sum = _supcon_tile(a_ref[...], c_ref[...], pos_w, not_self, row_valid,
                            inv_temp)
    out_ref[...] = jnp.full(out_ref.shape, tile_sum, dtype=jnp.float32)


def supcon_loss(features, labels=None, mask=None, *, temperature=0.07,
                contrast_mode='all', base_temperature=0.07, tile_m=256):
    """JAX/Pallas equivalent of SupConLoss.forward.

    features: [bsz, n_views, dim] (or [bsz, n_views, ...] -> flattened)
    labels:   [bsz] int, optional
    mask:     [bsz, bsz] float, optional
    """
    if features.ndim < 3:
        raise ValueError('`features` needs to be [bsz, n_views, ...]')
    if features.ndim > 3:
        features = features.reshape(features.shape[0], features.shape[1], -1)
    if labels is not None and mask is not None:
        raise ValueError('Cannot define both `labels` and `mask`')

    bsz, n_views, dim = features.shape
    contrast_count = n_views
    # torch.cat(torch.unbind(features, 1), 0) -> view-major stacking; bf16 for MXU.
    contrast_feature = jnp.transpose(features, (1, 0, 2)).reshape(
        n_views * bsz, dim).astype(jnp.bfloat16)
    if contrast_mode == 'one':
        anchor_feature = features[:, 0].astype(jnp.bfloat16)
        anchor_count = 1
    elif contrast_mode == 'all':
        anchor_feature = contrast_feature
        anchor_count = contrast_count
    else:
        raise ValueError('Unknown mode: {}'.format(contrast_mode))

    n_anchor = anchor_count * bsz
    n_contrast = contrast_count * bsz

    # Row tiling: TILE_M anchor rows per grid step (multiple of 16 for bf16
    # sublane packing; 256 matches the v6e/v7x 256-wide MXU and is 2x128 on v5e).
    tile_m = min(tile_m, _round_up(n_anchor, 16))
    n_pad = _round_up(n_anchor, tile_m)
    num_tiles = n_pad // tile_m
    pad = n_pad - n_anchor
    anchor_feature = jnp.pad(anchor_feature, ((0, pad), (0, 0)))

    common_specs = [
        pl.BlockSpec((tile_m, dim), lambda i: (i, 0)),       # anchor tile
        pl.BlockSpec((n_contrast, dim), lambda i: (0, 0)),   # contrast, resident
    ]
    out_spec = pl.BlockSpec((1, 1, 128), lambda i: (i, 0, 0))
    out_shape = jax.ShapeDtypeStruct((num_tiles, 1, 128), jnp.float32)
    cparams = pltpu.CompilerParams(
        dimension_semantics=("parallel",),     # independent row tiles (v7x 2 TC)
        vmem_limit_bytes=64 * 1024 * 1024)

    inv_temp = float(1.0 / temperature)

    if mask is None:
        if labels is None:
            base_labels = jnp.arange(bsz, dtype=jnp.int32)  # eye(bsz) == id labels
        else:
            labels = jnp.asarray(labels).reshape(-1)
            if labels.shape[0] != bsz:
                raise ValueError('Num of labels does not match num of features')
            base_labels = labels.astype(jnp.int32)
        c_labels = jnp.tile(base_labels, contrast_count).reshape(1, n_contrast)
        a_labels = jnp.pad(jnp.tile(base_labels, anchor_count),
                           (0, pad)).reshape(n_pad, 1)
        kernel = functools.partial(_supcon_label_kernel, inv_temp=inv_temp,
                                   n_anchor=n_anchor)
        partials = pl.pallas_call(
            kernel,
            out_shape=out_shape,
            grid=(num_tiles,),
            in_specs=common_specs + [
                pl.BlockSpec((tile_m, 1), lambda i: (i, 0)),      # anchor labels
                pl.BlockSpec((1, n_contrast), lambda i: (0, 0)),  # contrast labels
            ],
            out_specs=out_spec,
            compiler_params=cparams,
        )(anchor_feature, contrast_feature, a_labels, c_labels)
    else:
        mask_full = jnp.tile(jnp.asarray(mask, dtype=jnp.float32),
                             (anchor_count, contrast_count))
        mask_full = jnp.pad(mask_full, ((0, pad), (0, 0)))
        kernel = functools.partial(_supcon_mask_kernel, inv_temp=inv_temp,
                                   n_anchor=n_anchor)
        partials = pl.pallas_call(
            kernel,
            out_shape=out_shape,
            grid=(num_tiles,),
            in_specs=common_specs + [
                pl.BlockSpec((tile_m, n_contrast), lambda i: (i, 0)),
            ],
            out_specs=out_spec,
            compiler_params=cparams,
        )(anchor_feature, contrast_feature, mask_full)

    total = jnp.sum(partials[:, 0, 0])
    # loss.view(anchor_count, batch_size).mean() == mean over all N anchors
    return -(temperature / base_temperature) * total / n_anchor


def _supcon_loss_ref(features, labels=None, mask=None, *, temperature=0.07,
                     contrast_mode='all', base_temperature=0.07):
    """Pure-JAX mirror of the PyTorch module, using the same bf16-rounded matmul
    inputs as the kernel so the comparison tolerance can stay tight."""
    bsz, n_views, dim = features.shape
    features = features.astype(jnp.float32)
    if labels is None and mask is None:
        m = jnp.eye(bsz, dtype=jnp.float32)
    elif labels is not None:
        labels = labels.reshape(-1, 1)
        m = (labels == labels.T).astype(jnp.float32)
    else:
        m = mask.astype(jnp.float32)
    cf = jnp.transpose(features, (1, 0, 2)).reshape(n_views * bsz, dim)
    if contrast_mode == 'one':
        af = features[:, 0]
        anchor_count = 1
    else:
        af = cf
        anchor_count = n_views
    n_a, n_c = anchor_count * bsz, n_views * bsz
    cf_b = cf.astype(jnp.bfloat16).astype(jnp.float32)
    af_b = ((af.astype(jnp.bfloat16).astype(jnp.float32) * (1.0 / temperature))
            .astype(jnp.bfloat16).astype(jnp.float32))
    adc = af_b @ cf_b.T
    logits = adc - jnp.max(adc, axis=1, keepdims=True)
    m = jnp.tile(m, (anchor_count, n_views))
    logits_mask = 1.0 - jnp.eye(n_a, n_c, dtype=jnp.float32)
    m = m * logits_mask
    exp_logits = jnp.exp(logits) * logits_mask
    log_prob = logits - jnp.log(exp_logits.sum(1, keepdims=True))
    mean_log_prob_pos = (m * log_prob).sum(1) / m.sum(1)
    loss = -(temperature / base_temperature) * mean_log_prob_pos
    return loss.reshape(anchor_count, bsz).mean()


if __name__ == "__main__":
    key = jax.random.PRNGKey(0)
    k1, k2 = jax.random.split(key)

    bsz, n_views, dim = 8, 2, 32
    features = jax.random.normal(k1, (bsz, n_views, dim), dtype=jnp.float32)
    # L2-normalize features as typical for SupCon usage
    features = features / jnp.linalg.norm(features, axis=-1, keepdims=True)
    labels = jax.random.randint(k2, (bsz,), 0, 4)
    explicit_mask = (labels.reshape(-1, 1) == labels.reshape(1, -1)
                     ).astype(jnp.float32)

    loss_sup = supcon_loss(features, labels=labels)                 # supervised
    loss_unsup = supcon_loss(features)                              # SimCLR
    loss_mask = supcon_loss(features, mask=explicit_mask)           # explicit mask
    loss_one = supcon_loss(features, labels=labels, contrast_mode='one')
    jax.block_until_ready((loss_sup, loss_unsup, loss_mask, loss_one))

    ref_sup = _supcon_loss_ref(features, labels=labels)
    ref_unsup = _supcon_loss_ref(features)
    ref_one = _supcon_loss_ref(features, labels=labels, contrast_mode='one')

    assert jnp.allclose(loss_sup, ref_sup, rtol=1e-3, atol=1e-3), (loss_sup, ref_sup)
    assert jnp.allclose(loss_unsup, ref_unsup, rtol=1e-3, atol=1e-3), (loss_unsup, ref_unsup)
    assert jnp.allclose(loss_mask, loss_sup, rtol=1e-3, atol=1e-3), (loss_mask, loss_sup)
    assert jnp.allclose(loss_one, ref_one, rtol=1e-3, atol=1e-3), (loss_one, ref_one)

    print("KERNEL_OK")
</pallas_src>

<mosaic_0001>
module attributes {stable_mosaic.version = 11 : i64} {
  func.func @_supcon_label_kernel(%arg0: i32, %arg1: memref<16x32xbf16, #tpu.memory_space<vmem>>, %arg2: memref<16x32xbf16, #tpu.memory_space<vmem>>, %arg3: memref<16x1xi32, #tpu.memory_space<vmem>>, %arg4: memref<1x16xi32, #tpu.memory_space<vmem>>, %arg5: memref<1x1x128xf32, #tpu.memory_space<vmem>>) attributes {dimension_semantics = [#tpu.dimension_semantics<parallel>], iteration_bounds = array<i64: 1>, scalar_prefetch = 0 : i64, scratch_operands = 0 : i64, tpu.core_type = #tpu.core_type<tc>, window_params = [{transform_indices = @transform_0, window_bounds = array<i64: 16, 32>}, {pipeline_mode = #tpu.pipeline_mode<synchronous>, transform_indices = @transform_1, window_bounds = array<i64: 16, 32>}, {transform_indices = @transform_2, window_bounds = array<i64: 16, 1>}, {pipeline_mode = #tpu.pipeline_mode<synchronous>, transform_indices = @transform_3, window_bounds = array<i64: 1, 16>}, {transform_indices = @transform_4, window_bounds = array<i64: 1, 1, 128>}]} {
    %0 = tpu.iota {dimensions = array<i32: 0>} : vector<16x1xi32>
    %c16_i32 = arith.constant 16 : i32
    %1 = arith.muli %arg0, %c16_i32 : i32
    %2 = vector.broadcast %1 : i32 to vector<16x1xi32>
    %3 = arith.addi %0, %2 : vector<16x1xi32>
    %4 = tpu.iota {dimensions = array<i32: 1>} : vector<16x16xi32>
    %5 = vector.broadcast %3 : vector<16x1xi32> to vector<16x16xi32>
    %6 = arith.cmpi ne, %4, %5 : vector<16x16xi32>
    %c0 = arith.constant 0 : index
    %c0_0 = arith.constant 0 : index
    %7 = vector.load %arg3[%c0, %c0_0] : memref<16x1xi32, #tpu.memory_space<vmem>>, vector<16x1xi32>
    %c0_1 = arith.constant 0 : index
    %c0_2 = arith.constant 0 : index
    %8 = vector.load %arg4[%c0_1, %c0_2] : memref<1x16xi32, #tpu.memory_space<vmem>>, vector<1x16xi32>
    %9 = vector.broadcast %7 : vector<16x1xi32> to vector<16x16xi32>
    %10 = vector.broadcast %8 : vector<1x16xi32> to vector<16x16xi32>
    %11 = arith.cmpi eq, %9, %10 : vector<16x16xi32>
    %12 = arith.andi %11, %6 : vector<16x16xi1>
    %cst = arith.constant 1.000000e+00 : f32
    %cst_3 = arith.constant 0.000000e+00 : f32
    %13 = vector.broadcast %cst : f32 to vector<16x16xf32>
    %14 = vector.broadcast %cst_3 : f32 to vector<16x16xf32>
    %15 = arith.select %12, %13, %14 : vector<16x16xi1>, vector<16x16xf32>
    %c16_i32_4 = arith.constant 16 : i32
    %16 = vector.broadcast %c16_i32_4 : i32 to vector<16x1xi32>
    %17 = arith.cmpi slt, %3, %16 : vector<16x1xi32>
    %c0_5 = arith.constant 0 : index
    %c0_6 = arith.constant 0 : index
    %18 = vector.load %arg1[%c0_5, %c0_6] : memref<16x32xbf16, #tpu.memory_space<vmem>>, vector<16x32xbf16>
    %c0_7 = arith.constant 0 : index
    %c0_8 = arith.constant 0 : index
    %19 = vector.load %arg2[%c0_7, %c0_8] : memref<16x32xbf16, #tpu.memory_space<vmem>>, vector<16x32xbf16>
    %20 = arith.extf %18 : vector<16x32xbf16> to vector<16x32xf32>
    %cst_9 = arith.constant 14.2857141 : f32
    %21 = vector.broadcast %cst_9 : f32 to vector<16x32xf32>
    %22 = arith.mulf %20, %21 : vector<16x32xf32>
    %23 = arith.truncf %22 : vector<16x32xf32> to vector<16x32xbf16>
    %cst_10 = arith.constant dense<0.000000e+00> : vector<16x16xf32>
    %24 = tpu.matmul %23, %19, %cst_10 {dimension_numbers = #tpu.dot_dimension_numbers<[1], [1], [0], [0], [0, 0, 1, 0], [], []>} : vector<16x32xbf16>, vector<16x32xbf16>, vector<16x16xf32> -> vector<16x16xf32>
    %cst_11 = arith.constant dense<0xFF800000> : vector<16xf32>
    %25 = vector.multi_reduction <maximumf>, %24, %cst_11 [1] : vector<16x16xf32> to vector<16xf32>
    %26 = vector.shape_cast %25 : vector<16xf32> to vector<16x1xf32>
    %27 = vector.broadcast %26 : vector<16x1xf32> to vector<16x16xf32>
    %28 = arith.subf %24, %27 : vector<16x16xf32>
    %29 = math.exp %28 : vector<16x16xf32>
    %cst_12 = arith.constant 0.000000e+00 : f32
    %30 = vector.broadcast %cst_12 : f32 to vector<16x16xf32>
    %31 = arith.select %6, %29, %30 : vector<16x16xi1>, vector<16x16xf32>
    %cst_13 = arith.constant dense<0.000000e+00> : vector<16xf32>
    %32 = vector.multi_reduction <add>, %31, %cst_13 [1] : vector<16x16xf32> to vector<16xf32>
    %33 = vector.shape_cast %32 : vector<16xf32> to vector<16x1xf32>
    %34 = math.log %33 : vector<16x1xf32>
    %35 = vector.broadcast %34 : vector<16x1xf32> to vector<16x16xf32>
    %36 = arith.subf %28, %35 : vector<16x16xf32>
    %37 = arith.mulf %15, %36 : vector<16x16xf32>
    %cst_14 = arith.constant dense<0.000000e+00> : vector<16xf32>
    %38 = vector.multi_reduction <add>, %37, %cst_14 [1] : vector<16x16xf32> to vector<16xf32>
    %39 = vector.shape_cast %38 : vector<16xf32> to vector<16x1xf32>
    %cst_15 = arith.constant dense<0.000000e+00> : vector<16xf32>
    %40 = vector.multi_reduction <add>, %15, %cst_15 [1] : vector<16x16xf32> to vector<16xf32>
    %41 = vector.shape_cast %40 : vector<16xf32> to vector<16x1xf32>
    %42 = arith.divf %39, %41 : vector<16x1xf32>
    %cst_16 = arith.constant 0.000000e+00 : f32
    %43 = vector.broadcast %cst_16 : f32 to vector<16x1xf32>
    %44 = arith.select %17, %42, %43 : vector<16x1xi1>, vector<16x1xf32>
    %45 = vector.shape_cast %44 : vector<16x1xf32> to vector<1x16x1xf32>
    %cst_17 = arith.constant dense<0.000000e+00> : vector<1xf32>
    %46 = vector.multi_reduction <add>, %45, %cst_17 [1, 2] : vector<1x16x1xf32> to vector<1xf32>
    %47 = vector.shape_cast %46 : vector<1xf32> to vector<1x1x1xf32>
    %48 = vector.extract %47[0, 0, 0] : f32 from vector<1x1x1xf32>
    %49 = vector.broadcast %48 : f32 to vector<1x1x128xf32>
    %c0_18 = arith.constant 0 : index
    %c0_19 = arith.constant 0 : index
    %c0_20 = arith.constant 0 : index
    %50 = vector.load %arg5[%c0_18, %c0_19, %c0_20] : memref<1x1x128xf32, #tpu.memory_space<vmem>>, vector<1x1x128xf32>
    tpu.vector_store %arg5[%c0_18, %c0_19, %c0_20], %49 {strides = array<i32>} : memref<1x1x128xf32, #tpu.memory_space<vmem>>, vector<1x1x128xf32>,
    return
  }
  func.func @transform_0(%arg0: i32) -> (i32, i32) {
    %c0_i32 = arith.constant 0 : i32
    %c0_i32_0 = arith.constant 0 : i32
    return %arg0, %c0_i32 : i32, i32
  }
  func.func @transform_1(%arg0: i32) -> (i32, i32) {
    %c0_i32 = arith.constant 0 : i32
    %c0_i32_0 = arith.constant 0 : i32
    %c0_i32_1 = arith.constant 0 : i32
    return %c0_i32, %c0_i32_0 : i32, i32
  }
  func.func @transform_2(%arg0: i32) -> (i32, i32) {
    %c0_i32 = arith.constant 0 : i32
    %c0_i32_0 = arith.constant 0 : i32
    return %arg0, %c0_i32 : i32, i32
  }
  func.func @transform_3(%arg0: i32) -> (i32, i32) {
    %c0_i32 = arith.constant 0 : i32
    %c0_i32_0 = arith.constant 0 : i32
    %c0_i32_1 = arith.constant 0 : i32
    return %c0_i32, %c0_i32_0 : i32, i32
  }
  func.func @transform_4(%arg0: i32) -> (i32, i32, i32) {
    %c0_i32 = arith.constant 0 : i32
    %c0_i32_0 = arith.constant 0 : i32
    %c0_i32_1 = arith.constant 0 : i32
    return %arg0, %c0_i32, %c0_i32_0 : i32, i32, i32
  }
}

</mosaic_0001>

<llo_original>
// kernel: tpu_custom_call.1
$region0: #{tpu_custom_call.1}
  #allocation0 [shape = 'u32[]', space=smem, size = 0x4, offset = 0x4, fixed_abs, tag = 'smem constant byte address 0x4 - core index']
  #allocation1 [shape = 'u32[72,128]{1,0:T(1,128)}', space=vmem, size = 0x9000, scoped, tag = 'internal scratch']
  %s0 = inlined_call_operand.vmem [shape: bf16[16,32], index: 0, kind: input, shape index: {}]
  %s1 = inlined_call_operand.vmem [shape: bf16[16,32], index: 1, kind: input, shape index: {}]
  %s2 = inlined_call_operand.vmem [shape: s32[16,1], index: 2, kind: input, shape index: {}]
  %s3 = inlined_call_operand.vmem [shape: s32[1,16], index: 3, kind: input, shape index: {}]
  %s4 = inlined_call_operand.hbm [shape: f32[1,1,128], index: 4, kind: output, shape index: {}]
  %s5 = sld [smem:[#allocation0]]
  $region26: #{tpu_custom_call.1} parent=0
    _
  %s7 = ssub.s32 1, %s5
  %s8 = scalar_select 0, %s7, %s5
  $region1: #{tpu_custom_call.1} parent=0
    #allocation2 [shape = 'u8[512]{0}', space=vmem, size = 0x400, scoped, tag = 'output window, operand 0, single buffered']
    #allocation3 [shape = 's32[1]{0}', space=sflag, size = 0x4, scoped, tag = 'scoped memory for tpu_custom_call.1']
    %9 = vsyncpa [#allocation3], 0
    // Predicated region
    $region2: #{tpu_custom_call.1} parent=1 // pred_check
      _
    $region3: #{tpu_custom_call.1} parent=1 // pred_check_branch
      %11 = sbr.rel (0) target = $region5
    $region4: #{tpu_custom_call.1} parent=1 // pred_region
      _
    $region5: #{tpu_custom_call.1} parent=1 // pred_fallthru
      _
    // Predicated region
    $region6: #{tpu_custom_call.1} parent=1 // pred_check
      _
    $region7: #{tpu_custom_call.1} parent=1 // pred_check_branch
      %13 = sbr.rel (0) target = $region9
    $region8: #{tpu_custom_call.1} parent=1 // pred_region
      _
    $region9: #{tpu_custom_call.1} parent=1 // pred_fallthru
      _
    // Predicated region
    $region10: #{tpu_custom_call.1} parent=1 // pred_check
      _
    $region11: #{tpu_custom_call.1} parent=1 // pred_check_branch
      %15 = sbr.rel (0) target = $region13
    $region12: #{tpu_custom_call.1} parent=1 // pred_region
      _
    $region13: #{tpu_custom_call.1} parent=1 // pred_fallthru
      _
    // Predicated region
    $region14: #{tpu_custom_call.1} parent=1 // pred_check
      _
    $region15: #{tpu_custom_call.1} parent=1 // pred_check_branch
      %17 = sbr.rel (0) target = $region17
    $region16: #{tpu_custom_call.1} parent=1 // pred_region
      _
    $region17: #{tpu_custom_call.1} parent=1 // pred_fallthru
      _
    %v19 = vlaneseq
    %v20 = vshrl.u32 %v19, 7
    %v21 = vadd.s32 %v20, 8
    %s22 = smul.u32 0, 16
    %v23 = vstv %s22
    %v24 = vadd.s32 %v20, %v23
    %v25 = vadd.s32 %v21, %v23
    %v26 = vlaneseq
    %v27 = vand.u32 %v26, 127
    %vm28 = vcmp.ne.s32.totalorder %v27, %v24
    %vm29 = vcmp.ne.s32.totalorder %v27, %v25
    %v30 = vld [vmem:[%s2] sm:$0xff]
    %v31 = vld [vmem:[%s2 + $0x8] sm:$0xff]
    %v32 = vld [vmem:[%s3] sm:$0x1]
    %33 = vset.pattern.permute.xlu0 0
    %34 = vperm.xlu0 %33, %v30
    %v35 = vpop.permute.xlu0 %34
    %36 = vset.pattern.permute.xlu0 0
    %37 = vperm.xlu0 %36, %v31
    %v38 = vpop.permute.xlu0 %37
    %v39 = vperm.slane %v32, 0
    %vm40 = vcmp.eq.s32.totalorder %v35, %v39
    %vm41 = vcmp.eq.s32.totalorder %v38, %v39
    %vm42 = vmand %vm40, %vm28
    %vm43 = vmand %vm41, %vm29
    %v44 = vsel %vm42, 1.0, 0.0
    %v45 = vsel %vm43, 1.0, 0.0
    %vm46 = vcmp.lt.s32.totalorder %v24, 16
    %vm47 = vcmp.lt.s32.totalorder %v25, 16
    %v48 = vld [vmem:[%s0] sm:$0xf]
    %v49 = vld [vmem:[%s0 + $0x4] sm:$0xf]
    %v50 = vld [vmem:[%s1] sm:$0xf]
    %v51 = vld [vmem:[%s1 + $0x4] sm:$0xf]
    %v52 = vunpack.c.l.bf16 %v48
    %v53 = vunpack.c.l.bf16 %v49
    %v54 = vmul.f32 %v52, 14.285714
    %v55 = vmul.f32 %v53, 14.285714
    %v56 = vpack.c.bf16 %v55, %v54
    %v59 = vunpack.c.l.b16 %v50
    %v60 = vunpack.c.l.b16 %v51
    %v61 = vpack.c.b16 %v60, %v59
    %vm62 = vcmask 261120
    %v64 = vsel %vm62, %v56, 0
    %v67 = vsel %vm62, %v61, 0
    %69 = vmatpush.bf16.xpose.msra.mxu0 0
    %70 = vmatpush.bf16.xpose.msra.mxu0 0
    %71 = vmatpush.bf16.xpose.msra.mxu0 0
    %72 = vmatpush.bf16.xpose.msra.mxu0 0
    %73 = vmatpush.bf16.xpose.msra.mxu0 0
    %74 = vmatpush.bf16.xpose.msra.mxu0 0
    %75 = vmatpush.bf16.xpose.msra.mxu0 0
    %76 = vmatpush.bf16.xpose.msra.mxu0 %v67
    %77 = vmatmul.bf16.gmra.mxu0 %v64
    %v78 = vpop.f32.mrf.mxu0
    %v79 = vadd.f32 0.0, %v78
    %v80 = vpop.f32.mrf.mxu0
    %v81 = vadd.f32 0.0, %v80
    %82 = vdwg.mxu0
    %vm83 = vcmask 130048
    %v84 = vsel %vm83, %v79, -inf
    %85 = vmax.xlane.f32.xlu0 %v84
    %v86 = vpop.xlane.xlu0 %85
    %v87 = vsel %vm83, %v81, -inf
    %88 = vmax.xlane.f32.xlu0 %v87
    %v89 = vpop.xlane.xlu0 %88
    %v90 = vsub.f32 %v79, %v86
    %v91 = vsub.f32 %v81, %v89
    %v92 = vmul.f32 %v90, 1.442695
    %v93 = vpow.pop %v92
    %v94 = vmul.f32 %v91, 1.442695
    %v95 = vpow.pop %v94
    %v96 = vsel %vm28, %v93, 0.0
    %v97 = vsel %vm29, %v95, 0.0
    %v98 = vsel %vm83, %v96, 0.0
    %99 = vadd.xlane.f32.xlu0 %v98
    %v100 = vpop.xlane.xlu0 %99
    %v101 = vsel %vm83, %v97, 0.0
    %102 = vadd.xlane.f32.xlu0 %v101
    %v103 = vpop.xlane.xlu0 %102
    %v104 = vlog2.pop %v100
    %v105 = vmul.f32 %v104, 0.6931472
    %v106 = vlog2.pop %v103
    %v107 = vmul.f32 %v106, 0.6931472
    %v108 = vsub.f32 %v90, %v105
    %v109 = vsub.f32 %v91, %v107
    %v110 = vmul.f32 %v44, %v108
    %v111 = vmul.f32 %v45, %v109
    %v112 = vsel %vm83, %v110, 0.0
    %113 = vadd.xlane.f32.xlu0 %v112
    %v114 = vpop.xlane.xlu0 %113
    %v115 = vsel %vm83, %v111, 0.0
    %116 = vadd.xlane.f32.xlu0 %v115
    %v117 = vpop.xlane.xlu0 %116
    %v118 = vsel %vm83, %v44, 0.0
    %119 = vadd.xlane.f32.xlu0 %v118
    %v120 = vpop.xlane.xlu0 %119
    %v121 = vsel %vm83, %v45, 0.0
    %122 = vadd.xlane.f32.xlu0 %v121
    %v123 = vpop.xlane.xlu0 %122
    %v124 = vrcp.pop %v120
    %v125 = vmul.f32 %v120, %v124
    %v126 = vsub.f32 1.0, %v125
    %v127 = vmul.f32 %v124, %v126
    %v128 = vadd.f32 %v124, %v127
    %vm129 = vweird.f32 %v120
    %vm130 = vweird.f32 %v124
    %vm131 = vmor %vm129, %vm130
    %v132 = vsel %vm131, %v124, %v128
    %v133 = vand.u32 2147483647, %v120
    %vm134 = vcmp.eq.f32.partialorder %v133, 8.507059e+37
    %v135 = vand.u32 %v120, 2147483648
    %v136 = vor.u32 1.1754944e-38, %v135
    %v137 = vsel %vm134, %v136, %v132
    %v138 = vmul.f32 %v114, %v137
    %v139 = vrcp.pop %v123
    %v140 = vmul.f32 %v123, %v139
    %v141 = vsub.f32 1.0, %v140
    %v142 = vmul.f32 %v139, %v141
    %v143 = vadd.f32 %v139, %v142
    %vm144 = vweird.f32 %v123
    %vm145 = vweird.f32 %v139
    %vm146 = vmor %vm144, %vm145
    %v147 = vsel %vm146, %v139, %v143
    %v148 = vand.u32 2147483647, %v123
    %vm149 = vcmp.eq.f32.partialorder %v148, 8.507059e+37
    %v150 = vand.u32 %v123, 2147483648
    %v151 = vor.u32 1.1754944e-38, %v150
    %v152 = vsel %vm149, %v151, %v147
    %v153 = vmul.f32 %v117, %v152
    %v154 = vsel %vm46, %v138, 0.0
    %v155 = vsel %vm47, %v153, 0.0
    %vm156 = vcmask 7168
    %v157 = vsel %vm156, %v154, 0.0
    %v158 = vsel %vm156, %v155, 0.0
    %v159 = vadd.f32 %v157, %v158
    %160 = vadd.xlane.f32.xlu0 %v159
    %v161 = vpop.xlane.xlu0 %160
    %v162 = vrot.slane %v161, 4
    %v163 = vadd.f32 %v161, %v162
    %v164 = vrot.slane %v163, 2
    %v165 = vadd.f32 %v163, %v164
    %v166 = vrot.slane %v165, 1
    %v167 = vadd.f32 %v165, %v166
    %s168 = vtos %v167
    %v169 = vstv %s168
    %170 = vst [vmem:[#allocation2] sm:$0x1] %v169
    // Predicated region
    $region18: #{tpu_custom_call.1} parent=1 // pred_check
      _
    $region19: #{tpu_custom_call.1} parent=1 // pred_check_branch
      %172 = sbr.rel (0) target = $region21
    $region20: #{tpu_custom_call.1} parent=1 // pred_region
      %174 = vsyncadd [#allocation3], 0
      %s176 = sshll.u32 [#allocation2], 4
      %s177 = int_to_ptr.vmem [resolvable:$true] %s176
      %s178 = sshll.u32 %s4, 4
      %s179 = int_to_ptr.hbm [resolvable:$true] %s178
      %181 = dma.vmem_to_hbm [thread:$0]  %s177, 16, %s179, [#allocation3]
    $region21: #{tpu_custom_call.1} parent=1 // pred_fallthru
      _
    // Predicated region
    $region22: #{tpu_custom_call.1} parent=1 // pred_check
      _
    $region23: #{tpu_custom_call.1} parent=1 // pred_check_branch
      %183 = sbr.rel (0) target = $region25
    $region24: #{tpu_custom_call.1} parent=1 // pred_region
      %185 = dma.done [#allocation3], 16
    $region25: #{tpu_custom_call.1} parent=1 // pred_fallthru
      _
    %186 = vsyncpa [#allocation3], 1

</llo_original>
